<compile_context>
chip_gen: v7x
topology: tpu7x:2x2x1
jax: 0.10.0
libtpu: 0.0.40
codegen_flags: <defaults>
</compile_context>

<pallas_src>
import functools

import jax
import jax.numpy as jnp
from jax.experimental import pallas as pl
from jax.experimental.pallas import tpu as pltpu

EPS_BN = 1e-5
SOFTPLUS_THRESHOLD = 20.0  # matches torch.nn.Softplus(beta=1, threshold=20)


def _softplus(x):
    # torch.nn.Softplus: x if x > threshold else log(1 + exp(x))
    safe = jnp.minimum(x, SOFTPLUS_THRESHOLD)
    return jnp.where(x > SOFTPLUS_THRESHOLD, x, jnp.log1p(jnp.exp(safe)))


def _sigmoid(x):
    # 0.5*(tanh(x/2)+1): single EUP transcendental instead of exp + reciprocal.
    return 0.5 * (jnp.tanh(0.5 * x) + 1.0)


def _round_up(x, m):
    return ((x + m - 1) // m) * m


def _choose_row_tile(n_rows, m, afl, nbr_fl, budget_bytes=16 << 20):
    """Row tile (multiple of 8) sized from actual per-row tile bytes of the fused
    conv kernel (double-buffered streams + in-kernel f32 intermediates)."""
    per_row = (2 * (m * afl * 2          # gathered nbr atoms, bf16, double-buffered
                    + m * nbr_fl * 2     # bond features, bf16, double-buffered
                    + 8 * afl)           # atom in/out, f32, double-buffered
               + m * 2 * afl * 4         # gated intermediate (f32)
               + m * afl * 4)            # misc slack
    cap = max(8, budget_bytes // per_row)
    tile = min(2048, (cap // 8) * 8)
    n8 = _round_up(n_rows, 8)
    if n8 >= 16:
        # keep >= 2 grid steps so the "parallel" axis can shard across 2 TCs (v7x)
        tile = min(tile, max(8, (n8 // 2 // 8) * 8))
    tile = max(8, min(tile, n8))
    return tile


# ---------------------------------------------------------------------------
# Dense (Linear) kernel — row-tiled, used for the embedding.
# bf16 MXU inputs, f32 accumulation / bias / output.
# ---------------------------------------------------------------------------
def _dense_kernel(x_ref, w_ref, b_ref, o_ref, *, activation):
    y = jnp.dot(x_ref[...], w_ref[...], preferred_element_type=jnp.float32)
    y = y + b_ref[...]
    if activation == "softplus":
        y = _softplus(y)
    o_ref[...] = y.astype(o_ref.dtype)


def dense(x, w, b, activation=None, row_tile=None):
    n, din = x.shape
    dout = w.shape[1]
    if row_tile is None:
        row_tile = n
    assert n % row_tile == 0
    b2 = b.reshape(1, dout).astype(jnp.float32)
    kernel = functools.partial(_dense_kernel, activation=activation)
    return pl.pallas_call(
        kernel,
        out_shape=jax.ShapeDtypeStruct((n, dout), jnp.float32),
        grid=(n // row_tile,),
        in_specs=[
            pl.BlockSpec((row_tile, din), lambda i: (i, 0)),
            pl.BlockSpec((din, dout), lambda i: (0, 0)),
            pl.BlockSpec((1, dout), lambda i: (0, 0)),
        ],
        out_specs=pl.BlockSpec((row_tile, dout), lambda i: (i, 0)),
        compiler_params=pltpu.CompilerParams(
            dimension_semantics=("parallel",)),
    )(x.astype(jnp.bfloat16), w.astype(jnp.bfloat16), b2)


# ---------------------------------------------------------------------------
# Fused ConvLayer kernel: self matmul (per atom), neighbor + edge matmuls
# (per edge, flat 2-D dots), sigmoid/softplus gate, neighbor sum, BN2 (folded),
# residual + softplus — one launch per layer.
# ---------------------------------------------------------------------------
def _conv_kernel(atom_ref, an_ref, nf_ref, ws_ref, wn_ref, we_ref, b_ref,
                 bn2_ref, o_ref, *, afl, m, nbr_fl):
    atom_f32 = atom_ref[...]                                     # (t, afl) f32
    t_rows = atom_f32.shape[0]

    # per-atom "self" half of the gated features (BN1 scale + bias folded in)
    s = jnp.dot(atom_f32.astype(jnp.bfloat16), ws_ref[...],
                preferred_element_type=jnp.float32) + b_ref[...]  # (t, 2*afl)

    # per-edge halves: flat 2-D dots on the MXU (leading-dim merge is free)
    an = an_ref[...].reshape(t_rows * m, afl)                    # bf16
    ef = nf_ref[...].reshape(t_rows * m, nbr_fl)                 # bf16
    g = (jnp.dot(an, wn_ref[...], preferred_element_type=jnp.float32)
         + jnp.dot(ef, we_ref[...], preferred_element_type=jnp.float32))
    g = g.reshape(t_rows, m, 2 * afl) + s[:, None, :]            # (t, M, 2*afl)

    nbr_filter = _sigmoid(g[..., :afl])
    nbr_core = _softplus(g[..., afl:])
    summed = jnp.sum(nbr_filter * nbr_core, axis=1)              # (t, afl)
    summed = summed * bn2_ref[0:1, :] + bn2_ref[1:2, :]          # BN2 (eval, folded)
    o_ref[...] = _softplus(atom_f32 + summed).astype(o_ref.dtype)


def conv_layer(p, atom_fea, nbr_fea_bf16, nbr_idx, row_tile):
    """One CGCNN ConvLayer on the (padded, A+B batched) atom set."""
    n, afl = atom_fea.shape
    m = nbr_idx.shape[1]
    nbr_fl = nbr_fea_bf16.shape[2]
    assert n % row_tile == 0

    w, b = p["w"], p["b"]                        # (2*afl+nbr_fl, 2*afl), (2*afl,)
    g1, be1, m1, v1 = p["bn1"]
    s1 = g1 * jax.lax.rsqrt(v1 + EPS_BN)
    t1 = be1 - m1 * s1
    w_fold = w * s1[None, :]                     # BN1 scale folded into W columns
    b_fold = (b * s1 + t1).reshape(1, 2 * afl).astype(jnp.float32)

    w_self = w_fold[:afl].astype(jnp.bfloat16)               # (afl, 2*afl)
    w_nbr = w_fold[afl:2 * afl].astype(jnp.bfloat16)         # (afl, 2*afl)
    w_edge = w_fold[2 * afl:].astype(jnp.bfloat16)           # (nbr_fl, 2*afl)

    g2, be2, m2, v2 = p["bn2"]
    s2 = g2 * jax.lax.rsqrt(v2 + EPS_BN)
    t2 = be2 - m2 * s2
    bn2 = jnp.stack([s2, t2], axis=0).astype(jnp.float32)    # (2, afl)

    # Data-dependent gather stays in XLA, but only the afl-wide atom features
    # in bf16 are materialized (not the 2*afl f32 gated tensor).
    atom_nbr = atom_fea.astype(jnp.bfloat16)[nbr_idx]        # (n, m, afl) bf16

    kernel = functools.partial(_conv_kernel, afl=afl, m=m, nbr_fl=nbr_fl)
    return pl.pallas_call(
        kernel,
        out_shape=jax.ShapeDtypeStruct((n, afl), jnp.float32),
        grid=(n // row_tile,),
        in_specs=[
            pl.BlockSpec((row_tile, afl), lambda i: (i, 0)),         # atom_in (f32, residual)
            pl.BlockSpec((row_tile, m, afl), lambda i: (i, 0, 0)),   # gathered nbr atoms (bf16)
            pl.BlockSpec((row_tile, m, nbr_fl), lambda i: (i, 0, 0)),  # bond features (bf16)
            pl.BlockSpec((afl, 2 * afl), lambda i: (0, 0)),          # W_self (BN1-folded)
            pl.BlockSpec((afl, 2 * afl), lambda i: (0, 0)),          # W_nbr
            pl.BlockSpec((nbr_fl, 2 * afl), lambda i: (0, 0)),       # W_edge
            pl.BlockSpec((1, 2 * afl), lambda i: (0, 0)),            # bias (+BN1 shift)
            pl.BlockSpec((2, afl), lambda i: (0, 0)),                # BN2 scale/shift packed
        ],
        out_specs=pl.BlockSpec((row_tile, afl), lambda i: (i, 0)),
        compiler_params=pltpu.CompilerParams(
            dimension_semantics=("parallel",),
            vmem_limit_bytes=32 * 1024 * 1024),
    )(atom_fea.astype(jnp.float32), atom_nbr, nbr_fea_bf16,
      w_self, w_nbr, w_edge, b_fold, bn2)


# ---------------------------------------------------------------------------
# Pooling (ragged list of per-crystal index tensors) — single gather + segment
# reduction in XLA (exactly equivalent to torch's per-crystal mean).
# ---------------------------------------------------------------------------
def pooling(atom_fea, crystal_atom_idx):
    n_crys = len(crystal_atom_idx)
    flat_idx = jnp.concatenate([idx.astype(jnp.int32) for idx in crystal_atom_idx])
    seg = jnp.concatenate([jnp.full((int(idx.shape[0]),), c, jnp.int32)
                           for c, idx in enumerate(crystal_atom_idx)])
    gathered = atom_fea[flat_idx]
    sums = jax.ops.segment_sum(gathered, seg, num_segments=n_crys)
    counts = jnp.asarray([int(idx.shape[0]) for idx in crystal_atom_idx], jnp.float32)
    return sums / counts[:, None]


# ---------------------------------------------------------------------------
# Fused tail kernel: dense_feature(+softplus) on both crystals, combine,
# feature_ff stack, fc_out — one launch instead of many tiny 32x32 matmuls.
# ---------------------------------------------------------------------------
def _tail_kernel(*refs, n_h, combine):
    crys_a_ref, crys_b_ref, wdf_ref, bdf_ref = refs[:4]
    ff_refs = refs[4:4 + 2 * n_h]
    wout_ref, bout_ref, o_ref = refs[4 + 2 * n_h:4 + 2 * n_h + 3]

    def lin(x, w_ref, b_ref):
        return jnp.dot(x, w_ref[...], preferred_element_type=jnp.float32) + b_ref[...]

    a = _softplus(lin(crys_a_ref[...], wdf_ref, bdf_ref))
    b = _softplus(lin(crys_b_ref[...], wdf_ref, bdf_ref))
    if combine == "subtract_abs":
        x = jnp.abs(a - b)
    elif combine == "subtract":
        x = a - b
    elif combine == "add":
        x = a + b
    elif combine == "mean":
        x = 0.5 * (a + b)
    else:
        raise ValueError(combine)
    for i in range(n_h):
        x = _softplus(lin(x, ff_refs[2 * i], ff_refs[2 * i + 1]))
        # Dropout: identity in eval mode.
    o_ref[...] = lin(x, wout_ref, bout_ref).astype(o_ref.dtype)


def tail(crys_a, crys_b, params, combine):
    n_crys = crys_a.shape[0]
    df_w, df_b = params["dense_feature"]
    h = df_w.shape[1]
    args = [crys_a.astype(jnp.float32), crys_b.astype(jnp.float32),
            df_w.astype(jnp.float32), df_b.reshape(1, h).astype(jnp.float32)]
    n_h = len(params["feature_ff"])
    for (w, b) in params["feature_ff"]:
        args.append(w.astype(jnp.float32))
        args.append(b.reshape(1, h).astype(jnp.float32))
    out_w, out_b = params["fc_out"]
    args.append(out_w.astype(jnp.float32))
    args.append(out_b.reshape(1, 1).astype(jnp.float32))

    kernel = functools.partial(_tail_kernel, n_h=n_h, combine=combine)
    in_specs = [pl.BlockSpec(a.shape, lambda i, nd=a.ndim: (0,) * nd) for a in args]
    return pl.pallas_call(
        kernel,
        out_shape=jax.ShapeDtypeStruct((n_crys, 1), jnp.float32),
        grid=(1,),
        in_specs=in_specs,
        out_specs=pl.BlockSpec((n_crys, 1), lambda i: (0, 0)),
    )(*args)


# ---------------------------------------------------------------------------
# Parameter init (deterministic, synthetic)
# ---------------------------------------------------------------------------
def _linear_init(key, din, dout):
    kw, kb = jax.random.split(key)
    w = jax.random.normal(kw, (din, dout), jnp.float32) / jnp.sqrt(float(din))
    b = 0.01 * jax.random.normal(kb, (dout,), jnp.float32)
    return w, b


def _bn_init(key, c):
    k1, k2, k3, k4 = jax.random.split(key, 4)
    gamma = 1.0 + 0.1 * jax.random.normal(k1, (c,), jnp.float32)
    beta = 0.05 * jax.random.normal(k2, (c,), jnp.float32)
    mean = 0.1 * jax.random.normal(k3, (c,), jnp.float32)
    var = jax.random.uniform(k4, (c,), jnp.float32, minval=0.5, maxval=1.5)
    return gamma, beta, mean, var


def init_params(key, orig_afl, nbr_fl, afl, n_conv, h_fea, n_h):
    keys = iter(jax.random.split(key, 8 + 4 * n_conv + 2 * n_h))
    params = {}
    params["embedding"] = _linear_init(next(keys), orig_afl, afl)
    convs = []
    for _ in range(n_conv):
        w, b = _linear_init(next(keys), 2 * afl + nbr_fl, 2 * afl)
        convs.append({
            "w": w, "b": b,
            "bn1": _bn_init(next(keys), 2 * afl),
            "bn2": _bn_init(next(keys), afl),
        })
    params["convs"] = convs
    params["dense_feature"] = _linear_init(next(keys), afl, h_fea)
    params["feature_ff"] = [_linear_init(next(keys), h_fea, h_fea) for _ in range(n_h)]
    params["fc_out"] = _linear_init(next(keys), h_fea, 1)
    return params


# ---------------------------------------------------------------------------
# Full forward pass (weight-shared between crystal A and B, batched together)
# ---------------------------------------------------------------------------
def paired_cgcnn_forward(params, A, B, combine_features="subtract_abs"):
    afl = params["embedding"][0].shape[1]
    n_a = A["atom_fea"].shape[0]
    n_b = B["atom_fea"].shape[0]
    m = A["nbr_idx"].shape[1]
    assert B["nbr_idx"].shape[1] == m
    nbr_fl = A["nbr_fea"].shape[2]

    # Batch A and B along the atom axis through the weight-shared layers.
    atom0 = jnp.concatenate([A["atom_fea"], B["atom_fea"]], axis=0).astype(jnp.float32)
    nbr_fea = jnp.concatenate([A["nbr_fea"], B["nbr_fea"]], axis=0).astype(jnp.float32)
    nbr_idx = jnp.concatenate([A["nbr_idx"], B["nbr_idx"] + n_a], axis=0).astype(jnp.int32)

    n_tot = n_a + n_b
    row_tile = _choose_row_tile(n_tot, m, afl, nbr_fl)
    n_pad = _round_up(n_tot, row_tile)
    pad = n_pad - n_tot
    if pad:
        atom0 = jnp.pad(atom0, ((0, pad), (0, 0)))
        nbr_fea = jnp.pad(nbr_fea, ((0, pad), (0, 0), (0, 0)))
        nbr_idx = jnp.pad(nbr_idx, ((0, pad), (0, 0)))  # padded rows gather row 0; outputs discarded

    # bond features are reused by every conv layer — cast to bf16 once.
    nbr_fea_bf16 = nbr_fea.astype(jnp.bfloat16)

    emb_w, emb_b = params["embedding"]
    atom_fea = dense(atom0, emb_w, emb_b, row_tile=row_tile)

    for p in params["convs"]:
        atom_fea = conv_layer(p, atom_fea, nbr_fea_bf16, nbr_idx, row_tile)

    crys_a = pooling(atom_fea[:n_a], A["crystal_idx"])
    crys_b = pooling(atom_fea[n_a:n_tot], B["crystal_idx"])
    return tail(crys_a, crys_b, params, combine_features)


# ---------------------------------------------------------------------------
# Example run
# ---------------------------------------------------------------------------
if __name__ == "__main__":
    # model config (small, consistent with the module's __init__)
    orig_atom_fea_len = 16
    nbr_fea_len = 8
    atom_fea_len = 32     # model_cfg.atom_feature_size
    n_conv = 2            # model_cfg.num_convlayers
    h_fea_len = 32        # model_cfg.hidden_feature_size
    n_h = 1               # model_cfg.num_hiddenlayers
    combine_features = "subtract_abs"

    key = jax.random.PRNGKey(0)
    k_par, k_a1, k_a2, k_a3, k_b1, k_b2, k_b3 = jax.random.split(key, 7)

    params = init_params(k_par, orig_atom_fea_len, nbr_fea_len,
                         atom_fea_len, n_conv, h_fea_len, n_h)

    # crystal batch A: 12 atoms in 2 crystals, M = 8 neighbors
    N_A, M = 12, 8
    A = {
        "atom_fea": jax.random.normal(k_a1, (N_A, orig_atom_fea_len), jnp.float32),
        "nbr_fea": jax.random.normal(k_a2, (N_A, M, nbr_fea_len), jnp.float32),
        "nbr_idx": jax.random.randint(k_a3, (N_A, M), 0, N_A, dtype=jnp.int32),
        "crystal_idx": [jnp.arange(0, 6, dtype=jnp.int32),
                        jnp.arange(6, 12, dtype=jnp.int32)],
    }
    # crystal batch B: 10 atoms in 2 crystals
    N_B = 10
    B = {
        "atom_fea": jax.random.normal(k_b1, (N_B, orig_atom_fea_len), jnp.float32),
        "nbr_fea": jax.random.normal(k_b2, (N_B, M, nbr_fea_len), jnp.float32),
        "nbr_idx": jax.random.randint(k_b3, (N_B, M), 0, N_B, dtype=jnp.int32),
        "crystal_idx": [jnp.arange(0, 5, dtype=jnp.int32),
                        jnp.arange(5, 10, dtype=jnp.int32)],
    }

    out = paired_cgcnn_forward(params, A, B, combine_features)
    out = jax.block_until_ready(out)
    assert out.shape == (2, 1)
    print("KERNEL_OK")
</pallas_src>

<mosaic_0001>
module attributes {stable_mosaic.version = 11 : i64} {
  func.func @_dense_kernel(%arg0: i32, %arg1: memref<8x16xbf16, #tpu.memory_space<vmem>>, %arg2: memref<16x32xbf16, #tpu.memory_space<vmem>>, %arg3: memref<1x32xf32, #tpu.memory_space<vmem>>, %arg4: memref<8x32xf32, #tpu.memory_space<vmem>>) attributes {dimension_semantics = [#tpu.dimension_semantics<parallel>], iteration_bounds = array<i64: 3>, scalar_prefetch = 0 : i64, scratch_operands = 0 : i64, tpu.core_type = #tpu.core_type<tc>, window_params = [{transform_indices = @transform_0, window_bounds = array<i64: 8, 16>}, {pipeline_mode = #tpu.pipeline_mode<synchronous>, transform_indices = @transform_1, window_bounds = array<i64: 16, 32>}, {pipeline_mode = #tpu.pipeline_mode<synchronous>, transform_indices = @transform_2, window_bounds = array<i64: 1, 32>}, {transform_indices = @transform_3, window_bounds = array<i64: 8, 32>}]} {
    %c0 = arith.constant 0 : index
    %c0_0 = arith.constant 0 : index
    %0 = vector.load %arg1[%c0, %c0_0] : memref<8x16xbf16, #tpu.memory_space<vmem>>, vector<8x16xbf16>
    %c0_1 = arith.constant 0 : index
    %c0_2 = arith.constant 0 : index
    %1 = vector.load %arg2[%c0_1, %c0_2] : memref<16x32xbf16, #tpu.memory_space<vmem>>, vector<16x32xbf16>
    %cst = arith.constant dense<0.000000e+00> : vector<8x32xf32>
    %2 = tpu.matmul %0, %1, %cst {dimension_numbers = #tpu.dot_dimension_numbers<[1], [0], [0], [1], [0, 0, 1, 1], [], []>} : vector<8x16xbf16>, vector<16x32xbf16>, vector<8x32xf32> -> vector<8x32xf32>
    %c0_3 = arith.constant 0 : index
    %c0_4 = arith.constant 0 : index
    %3 = vector.load %arg3[%c0_3, %c0_4] : memref<1x32xf32, #tpu.memory_space<vmem>>, vector<1x32xf32>
    %4 = vector.broadcast %3 : vector<1x32xf32> to vector<8x32xf32>
    %5 = arith.addf %2, %4 : vector<8x32xf32>
    %c0_5 = arith.constant 0 : index
    %c0_6 = arith.constant 0 : index
    %6 = vector.load %arg4[%c0_5, %c0_6] : memref<8x32xf32, #tpu.memory_space<vmem>>, vector<8x32xf32>
    tpu.vector_store %arg4[%c0_5, %c0_6], %5 {strides = array<i32>} : memref<8x32xf32, #tpu.memory_space<vmem>>, vector<8x32xf32>,
    return
  }
  func.func @transform_0(%arg0: i32) -> (i32, i32) {
    %c0_i32 = arith.constant 0 : i32
    %c0_i32_0 = arith.constant 0 : i32
    return %arg0, %c0_i32 : i32, i32
  }
  func.func @transform_1(%arg0: i32) -> (i32, i32) {
    %c0_i32 = arith.constant 0 : i32
    %c0_i32_0 = arith.constant 0 : i32
    %c0_i32_1 = arith.constant 0 : i32
    return %c0_i32, %c0_i32_0 : i32, i32
  }
  func.func @transform_2(%arg0: i32) -> (i32, i32) {
    %c0_i32 = arith.constant 0 : i32
    %c0_i32_0 = arith.constant 0 : i32
    %c0_i32_1 = arith.constant 0 : i32
    return %c0_i32, %c0_i32_0 : i32, i32
  }
  func.func @transform_3(%arg0: i32) -> (i32, i32) {
    %c0_i32 = arith.constant 0 : i32
    %c0_i32_0 = arith.constant 0 : i32
    return %arg0, %c0_i32 : i32, i32
  }
}

</mosaic_0001>

<llo_original>
// kernel: tpu_custom_call.1
$region0: #{tpu_custom_call.1}
  #allocation0 [shape = 'u32[]', space=smem, size = 0x4, offset = 0x4, fixed_abs, tag = 'smem constant byte address 0x4 - core index']
  #allocation1 [shape = 'u32[144,128]{1,0:T(1,128)}', space=vmem, size = 0x12000, scoped, tag = 'internal scratch']
  %s0 = inlined_call_operand.vmem [shape: bf16[24,16], index: 0, kind: input, shape index: {}]
  %s1 = inlined_call_operand.vmem [shape: bf16[16,32], index: 1, kind: input, shape index: {}]
  %s2 = inlined_call_operand.vmem [shape: f32[1,32], index: 2, kind: input, shape index: {}]
  %s3 = inlined_call_operand.hbm [shape: f32[24,32], index: 3, kind: output, shape index: {}]
  %s4 = sld [smem:[#allocation0]]
  $region45: #{tpu_custom_call.1} parent=0
    _
  %s6 = ssub.s32 1, %s4
  %s7 = scalar_select 0, %s6, %s4
  $region1: #{tpu_custom_call.1} parent=0
    #allocation2 [shape = 'u8[8192]{0}', space=vmem, size = 0x2000, scoped, tag = 'output window, operand 0']
    #allocation3 [shape = 's32[2]{0}', space=sflag, size = 0x8, scoped, tag = 'scoped memory for tpu_custom_call.1']
    %8 = vsyncpa [#allocation3], 0
    %s9 = scalar_lea.sflag [#allocation3], 1
    %10 = vsyncpa %s9, 0
    loop: start=0, step=1, limit=5
    $region2: #{tpu_custom_call.1} parent=1 // loop_pre_header
      _
    $region3: #{tpu_custom_call.1} parent=1 // loop_header
      %s12 = sphi 0, %s16
      %p13 = scmp.ge.s32.totalorder %s12, 5
      %s22 = sphi 0, %s24
      %s25 = sphi 0, %s22
      %s26 = sphi 0, %s25
      %s42 = sphi 0, %s26
      %s46 = sphi 0, %s46
      %s48 = sphi 0, %s46
      %s49 = sphi 0, %s48
      %s63 = sphi 0, %s49
      %s67 = sphi 0, %s67
      %s69 = sphi 0, %s67
      %s70 = sphi 0, %s69
      %s84 = sphi 0, %s70
      %s90 = sphi 0, %s92
      %s93 = sphi 0, %s90
      %s94 = sphi 0, %s93
      %s110 = sphi 0, %s94
    $region4: #{tpu_custom_call.1} parent=1 // loop_header_branch
      %15 = sbr.rel (%p13) target = $region8
    $region5: #{tpu_custom_call.1} parent=1 // loop_body
      %s17 = ssub.s32 %s12, 1
      %s18 = ssub.s32 %s12, 2
      %s19 = sadd.s32 %s12, 1
      %s20 = ssub.s32 %s12, %s19
      %p21 = scmp.eq.s32.totalorder %s20, 0
      %s23 = sadd.s32 %s22, 1
      %s24 = scalar_select %p21, %s22, %s23
      %p27 = pneg %p21
      %p28 = scmp.eq.s32.totalorder %s12, 2
      %p29 = por %p27, %p28
      %p30 = scmp.ne.s32.totalorder %s22, %s25
      %p31 = scmp.eq.s32.totalorder %s12, 0
      %p32 = por %p30, %p31
      %p33 = scmp.ne.s32.totalorder %s22, %s25
      %p34 = scmp.eq.s32.totalorder %s17, 2
      %p35 = por %p33, %p34
      %p36 = scmp.ne.s32.totalorder %s25, %s26
      %p37 = scmp.eq.s32.totalorder %s17, 0
      %p38 = por %p36, %p37
      %p39 = scmp.ne.s32.totalorder %s25, %s26
      %p40 = scmp.eq.s32.totalorder %s18, 2
      %p41 = por %p39, %p40
      %p43 = scmp.ne.s32.totalorder %s26, %s42
      %p44 = scmp.eq.s32.totalorder %s18, 0
      %p45 = por %p43, %p44
      %s47 = sadd.s32 %s46, 1
      %p50 = scmp.eq.s32.totalorder %s12, 2
      %p51 = scmp.ne.s32.totalorder %s46, %s48
      %p52 = scmp.eq.s32.totalorder %s12, 0
      %p53 = por %p51, %p52
      %p54 = scmp.ne.s32.totalorder %s46, %s48
      %p55 = scmp.eq.s32.totalorder %s17, 2
      %p56 = por %p54, %p55
      %p57 = scmp.ne.s32.totalorder %s48, %s49
      %p58 = scmp.eq.s32.totalorder %s17, 0
      %p59 = por %p57, %p58
      %p60 = scmp.ne.s32.totalorder %s48, %s49
      %p61 = scmp.eq.s32.totalorder %s18, 2
      %p62 = por %p60, %p61
      %p64 = scmp.ne.s32.totalorder %s49, %s63
      %p65 = scmp.eq.s32.totalorder %s18, 0
      %p66 = por %p64, %p65
      %s68 = sadd.s32 %s67, 1
      %p71 = scmp.eq.s32.totalorder %s12, 2
      %p72 = scmp.ne.s32.totalorder %s67, %s69
      %p73 = scmp.eq.s32.totalorder %s12, 0
      %p74 = por %p72, %p73
      %p75 = scmp.ne.s32.totalorder %s67, %s69
      %p76 = scmp.eq.s32.totalorder %s17, 2
      %p77 = por %p75, %p76
      %p78 = scmp.ne.s32.totalorder %s69, %s70
      %p79 = scmp.eq.s32.totalorder %s17, 0
      %p80 = por %p78, %p79
      %p81 = scmp.ne.s32.totalorder %s69, %s70
      %p82 = scmp.eq.s32.totalorder %s18, 2
      %p83 = por %p81, %p82
      %p85 = scmp.ne.s32.totalorder %s70, %s84
      %p86 = scmp.eq.s32.totalorder %s18, 0
      %p87 = por %p85, %p86
      %s88 = ssub.s32 %s12, %s19
      %p89 = scmp.eq.s32.totalorder %s88, 0
      %s91 = sadd.s32 %s90, 1
      %s92 = scalar_select %p89, %s90, %s91
      %p95 = pneg %p89
      %p96 = scmp.eq.s32.totalorder %s12, 2
      %p97 = por %p95, %p96
      %p98 = scmp.ne.s32.totalorder %s90, %s93
      %p99 = scmp.eq.s32.totalorder %s12, 0
      %p100 = por %p98, %p99
      %p101 = scmp.ne.s32.totalorder %s90, %s93
      %p102 = scmp.eq.s32.totalorder %s17, 2
      %p103 = por %p101, %p102
      %p104 = scmp.ne.s32.totalorder %s93, %s94
      %p105 = scmp.eq.s32.totalorder %s17, 0
      %p106 = por %p104, %p105
      %p107 = scmp.ne.s32.totalorder %s93, %s94
      %p108 = scmp.eq.s32.totalorder %s18, 2
      %p109 = por %p107, %p108
      %p111 = scmp.ne.s32.totalorder %s94, %s110
      %p112 = scmp.eq.s32.totalorder %s18, 0
      %p113 = por %p111, %p112
      %p114 = scmp.le.s32.totalorder 1, %s12
      %p115 = scmp.lt.s32.totalorder %s12, 4
      %p116 = pnand %p114, %p115
      %p117 = pneg %p116
      // Predicated region
      $region9: #{tpu_custom_call.1} parent=5 // pred_check
        _
      $region10: #{tpu_custom_call.1} parent=5 // pred_check_branch
        %119 = sbr.rel (%p116) target = $region12
      $region11: #{tpu_custom_call.1} parent=5 // pred_region
        %s120 = ssub.s32 %s12, 1
        // Predicated region
        $region13: #{tpu_custom_call.1} parent=11 // pred_check
          %p121 = pneg %p59
        $region14: #{tpu_custom_call.1} parent=11 // pred_check_branch
          %123 = sbr.rel (%p121) target = $region16
        $region15: #{tpu_custom_call.1} parent=11 // pred_region
          _
        $region16: #{tpu_custom_call.1} parent=11 // pred_fallthru
          _
        // Predicated region
        $region17: #{tpu_custom_call.1} parent=11 // pred_check
          %p124 = pneg %p80
        $region18: #{tpu_custom_call.1} parent=11 // pred_check_branch
          %126 = sbr.rel (%p124) target = $region20
        $region19: #{tpu_custom_call.1} parent=11 // pred_region
          _
        $region20: #{tpu_custom_call.1} parent=11 // pred_fallthru
          _
      $region12: #{tpu_custom_call.1} parent=5 // pred_fallthru
        _
      %p127 = scmp.lt.s32.totalorder %s12, 3
      // Predicated region
      $region21: #{tpu_custom_call.1} parent=5 // pred_check
        %p128 = pneg %p127
      $region22: #{tpu_custom_call.1} parent=5 // pred_check_branch
        %130 = sbr.rel (%p128) target = $region24
      $region23: #{tpu_custom_call.1} parent=5 // pred_region
        // Predicated region
        $region25: #{tpu_custom_call.1} parent=23 // pred_check
          %p131 = pneg %p32
        $region26: #{tpu_custom_call.1} parent=23 // pred_check_branch
          %133 = sbr.rel (%p131) target = $region28
        $region27: #{tpu_custom_call.1} parent=23 // pred_region
          %p134 = scmp.lt.s32.totalorder %s12, 2
          %s135 = scalar_select %p134, %s12, 2
          %s136 = smul.addr %s135, 4
          %s137 = scalar_lea.vmem %s0, %s136
        $region28: #{tpu_custom_call.1} parent=23 // pred_fallthru
          _
      $region24: #{tpu_custom_call.1} parent=5 // pred_fallthru
        _
      %p138 = scmp.le.s32.totalorder 1, %s12
      %p139 = scmp.lt.s32.totalorder %s12, 4
      %p140 = pnand %p138, %p139
      %p141 = pneg %p140
      // Predicated region
      $region29: #{tpu_custom_call.1} parent=5 // pred_check
        _
      $region30: #{tpu_custom_call.1} parent=5 // pred_check_branch
        %143 = sbr.rel (%p140) target = $region32
      $region31: #{tpu_custom_call.1} parent=5 // pred_region
        %s144 = ssub.s32 %s12, 1
        %p145 = scmp.lt.s32.totalorder %s17, 2
        %s146 = scalar_select %p145, %s17, 2
        %s147 = smul.addr %s146, 4
        %s148 = scalar_lea.vmem %s0, %s147
        %p149 = pneg %p38
        %p150 = pneg %p35
        %p151 = pneg %p59
        %p152 = pneg %p56
        %p153 = pneg %p80
        %p154 = pneg %p77
        %p155 = pneg %p106
        %p156 = pneg %p103
        %s157 = sand.u32 %s93, 1
        %s158 = scalar_lea.sflag [#allocation3], %s157
        %s159 = sand.u32 %s93, 1
        %s160 = smul.addr %s159, 8
        %s161 = scalar_lea.vmem [#allocation2], %s160
        %p162 = scmp.lt.s32.totalorder %s17, 2
        %s163 = scalar_select %p162, %s17, 2
        %s164 = smul.addr %s163, 4
        %s165 = scalar_lea.vmem %s0, %s164
        %v167 = vld [vmem:[%s165] sm:$0xf]
        %v168 = vld [vmem:[%s1] sm:$0xf]
        %v169 = vld [vmem:[%s1 + $0x4] sm:$0xf]
        %v170 = vld [vmem:[%s2] sm:$0x1]
        %v172 = vlaneseq
        %v173 = vshrl.u32 %v172, 7
        %v174 = vsub.s32 0, %v173
        %v175 = vrot.slane %v170, %v174
        %v179 = vunpack.c.l.b16 %v168
        %v180 = vunpack.c.l.b16 %v169
        %v181 = vpack.c.b16 %v180, %v179
        %vm183 = vcmask 130048
        %v185 = vsel %vm183, %v167, 0
        %187 = vmatprep.subr.bf16.mxu0 0
        %188 = vmatpush1.bf16.msra.mxu0 %v181
        %189 = vmatprep.subr.bf16.mxu0 0
        %190 = vmatpush1.bf16.msra.mxu0 0
        %191 = vmatprep.subr.bf16.mxu0 0
        %192 = vmatpush1.bf16.msra.mxu0 0
        %193 = vmatprep.subr.bf16.mxu0 0
        %194 = vmatpush1.bf16.msra.mxu0 0
        %195 = vmatprep.subr.bf16.mxu0 0
        %196 = vmatpush1.bf16.msra.mxu0 0
        %197 = vmatprep.subr.bf16.mxu0 0
        %198 = vmatpush1.bf16.msra.mxu0 0
        %199 = vmatprep.subr.bf16.mxu0 0
        %200 = vmatpush1.bf16.msra.mxu0 0
        %201 = vmatprep.subr.bf16.mxu0 0
        %202 = vmatpush1.bf16.msra.mxu0 0
        %203 = vmatprep.subr.bf16.mxu0 0
        %204 = vmatpush1.bf16.msra.mxu0 0
        %205 = vmatprep.subr.bf16.mxu0 0
        %206 = vmatpush1.bf16.msra.mxu0 0
        %207 = vmatprep.subr.bf16.mxu0 0
        %208 = vmatpush1.bf16.msra.mxu0 0
        %209 = vmatprep.subr.bf16.mxu0 0
        %210 = vmatpush1.bf16.msra.mxu0 0
        %211 = vmatprep.subr.bf16.mxu0 0
        %212 = vmatpush1.bf16.msra.mxu0 0
        %213 = vmatprep.subr.bf16.mxu0 0
        %214 = vmatpush1.bf16.msra.mxu0 0
        %215 = vmatprep.subr.bf16.mxu0 0
        %216 = vmatpush1.bf16.msra.mxu0 0
        %217 = vmatprep.subr.bf16.mxu0 0
        %218 = vmatpush1.bf16.msra.mxu0 0
        %219 = vmatprep.mubr.bf16.mxu0 0
        %220 = vmatmul.mubr.bf16.gmra.mrb[0].mxu0 %v185
        %v221 = vpop.f32.mrb[0].mxu0
        %v222 = vadd.f32 %v175, %v221
        %v223 = vpop.f32.mrb[0].mxu0
        %v224 = vpop.f32.mrb[0].mxu0
        %v225 = vpop.f32.mrb[0].mxu0
        %226 = vdwg.mxu0
        %vm227 = vcmask 261120
        %228 = vst.msk [vmem:[%s161] sm:$0xff] %vm227, %v222
        %s229 = sand.u32 %s93, 1
        %s230 = scalar_lea.sflag [#allocation3], %s229
        %s231 = sand.u32 %s93, 1
        %s232 = smul.addr %s231, 8
        %s233 = scalar_lea.vmem [#allocation2], %s232
        // Predicated region
        $region33: #{tpu_custom_call.1} parent=31 // pred_check
          %p234 = pneg %p103
        $region34: #{tpu_custom_call.1} parent=31 // pred_check_branch
          %236 = sbr.rel (%p234) target = $region36
        $region35: #{tpu_custom_call.1} parent=31 // pred_region
          %s238 = ssub.s32 128, 128
          %239 = vsyncadd %s230, %s238
          %s240 = smul.addr %s17, 128
          %s241 = scalar_lea.hbm %s3, %s240
          %s243 = sshll.u32 %s233, 4
          %s244 = int_to_ptr.vmem [resolvable:$true] %s243
          %246 = dma.vmem_to_hbm [thread:$0]  %s244, 128, %s241, %s230
        $region36: #{tpu_custom_call.1} parent=31 // pred_fallthru
          _
      $region32: #{tpu_custom_call.1} parent=5 // pred_fallthru
        _
      %p247 = scmp.le.s32.totalorder 2, %s12
      // Predicated region
      $region37: #{tpu_custom_call.1} parent=5 // pred_check
        %p248 = pneg %p247
      $region38: #{tpu_custom_call.1} parent=5 // pred_check_branch
        %250 = sbr.rel (%p248) target = $region40
      $region39: #{tpu_custom_call.1} parent=5 // pred_region
        %s251 = ssub.s32 %s12, 2
        // Predicated region
        $region41: #{tpu_custom_call.1} parent=39 // pred_check
          %p252 = pneg %p109
        $region42: #{tpu_custom_call.1} parent=39 // pred_check_branch
          %254 = sbr.rel (%p252) target = $region44
        $region43: #{tpu_custom_call.1} parent=39 // pred_region
          %s255 = sand.u32 %s94, 1
          %s256 = scalar_lea.sflag [#allocation3], %s255
          %s257 = sand.u32 %s94, 1
          %s258 = smul.addr %s257, 8
          %s259 = scalar_lea.vmem [#allocation2], %s258
          %260 = dma.done %s256, 128
        $region44: #{tpu_custom_call.1} parent=39 // pred_fallthru
          _
      $region40: #{tpu_custom_call.1} parent=5 // pred_fallthru
        _
    $region6: #{tpu_custom_call.1} parent=1 // loop_footer
      %s16 = sadd.s32 1, %s12
    $region7: #{tpu_custom_call.1} parent=1 // loop_footer_branch
      %11 = sbr.rel target = $region3
    $region8: #{tpu_custom_call.1} parent=1 // loop_exit
      _
    %261 = vsyncpa [#allocation3], 1
    %s262 = scalar_lea.sflag [#allocation3], 1
    %263 = vsyncpa %s262, 1

</llo_original>
